<compile_context>
chip_gen: v7x
topology: tpu7x:2x2x1
jax: 0.10.0
libtpu: 0.0.40
codegen_flags: <defaults>
</compile_context>

<pallas_src>
import math

import jax
import jax.numpy as jnp
from jax.experimental import pallas as pl
from jax.experimental.pallas import tpu as pltpu


def _weight_sparse2_kernel(x_ref, w_ref, o_ref):
    # Elementwise broadcast multiply on the VPU: (T, L) * (1, L) -> (T, L).
    o_ref[...] = x_ref[...] * w_ref[...]


_TARGET_BLOCK_BYTES = 2 * 1024 * 1024   # ~2 MiB per x block (double-buffered)
_MAX_LANES = 2048                       # cap on lane-dense slab width


def _pick_row_tile(n_rows, n_lanes, itemsize, target_block_bytes):
    """Rows per block: multiple of 8, sized so one block is ~target_block_bytes."""
    if n_rows <= 8:
        return int(n_rows)
    rows = (target_block_bytes // (n_lanes * itemsize)) // 8 * 8
    rows = max(8, rows)
    return int(min(rows, n_rows))


def _run(x2d, w2d, tile_rows):
    R, L = x2d.shape
    return pl.pallas_call(
        _weight_sparse2_kernel,
        out_shape=jax.ShapeDtypeStruct((R, L), x2d.dtype),
        grid=(pl.cdiv(R, tile_rows),),
        in_specs=[
            pl.BlockSpec((tile_rows, L), lambda i: (i, 0)),
            # Constant block index -> weight stays resident in VMEM across the grid.
            pl.BlockSpec((1, L), lambda i: (0, 0)),
        ],
        out_specs=pl.BlockSpec((tile_rows, L), lambda i: (i, 0)),
        compiler_params=pltpu.CompilerParams(
            dimension_semantics=("parallel",),     # shard rows across TCs on v7x
            vmem_limit_bytes=32 * 1024 * 1024,     # explicit budget; safe on v5e..v7x
        ),
    )(x2d, w2d)


def weight_sparse2(x, weight, *, max_lanes=_MAX_LANES,
                   target_block_bytes=_TARGET_BLOCK_BYTES):
    """Forward of Weight_Sparse2: x (B, F) * weight (F,) -> (B, F)."""
    B, F = x.shape
    assert weight.shape == (F,)
    weight = weight.astype(x.dtype)          # output dtype follows x (bf16-friendly)
    total = B * F
    itemsize = jnp.dtype(x.dtype).itemsize

    lane_base = (F * 128) // math.gcd(F, 128)  # lcm(F, 128)

    if total % lane_base == 0:
        # Lane-dense path: flatten to (R, L), L a multiple of both F and 128, so
        # every vector store is a full unmasked 128-lane vst and the tiled weight
        # lines up with whole feature vectors per row.
        L = lane_base
        while L * 2 <= max_lanes and total % (L * 2) == 0:
            L *= 2
        R = total // L
        x2d = x.reshape(R, L)
        w2d = jnp.tile(weight, L // F).reshape(1, L)
        tile_rows = _pick_row_tile(R, L, itemsize, target_block_bytes)
        return _run(x2d, w2d, tile_rows).reshape(B, F)

    # Fallback (tiny / awkward F): batch-tiled grid with full-F blocks.
    # Last block dim equals the full array extent, which satisfies the layout rule.
    w2d = weight.reshape(1, F)
    tile_rows = _pick_row_tile(B, F, itemsize, target_block_bytes)
    return _run(x, w2d, tile_rows)


if __name__ == "__main__":
    # Module configuration (small, consistent with the forward pass).
    in_nodes = 8
    clinical_nodes = 4
    F = in_nodes * clinical_nodes  # 32

    key = jax.random.PRNGKey(0)
    k_coef, k_x1, k_x2, k_x3 = jax.random.split(key, 4)

    # Synthetic stand-in for model_reg.coef_ (deterministic; no checkpoint load).
    coef = jax.random.normal(
        k_coef, (in_nodes + in_nodes * clinical_nodes,), dtype=jnp.float32
    )
    # weight.data = coef[in_nodes : in_nodes*clinical_nodes + in_nodes]
    weight = coef[in_nodes: in_nodes * clinical_nodes + in_nodes]

    # Case 1: tiny batch (the module's typical use) -> full-array fallback path.
    x_small = jax.random.normal(k_x1, (2, F), dtype=jnp.float32)
    out_small = jax.block_until_ready(weight_sparse2(x_small, weight))
    assert out_small.shape == (2, F)
    assert jnp.allclose(out_small, x_small * weight[None, :], atol=1e-6, rtol=1e-6)

    # Case 2: modest batch -> lane-dense repacked path (128-lane unmasked stores).
    x_big = jax.random.normal(k_x2, (64, F), dtype=jnp.float32)
    out_big = jax.block_until_ready(weight_sparse2(x_big, weight))
    assert out_big.shape == (64, F)
    assert jnp.allclose(out_big, x_big * weight[None, :], atol=1e-6, rtol=1e-6)

    # Case 3: exercise the multi-step pipelined grid (small caps force grid > 1).
    x_grid = jax.random.normal(k_x3, (256, F), dtype=jnp.float32)
    out_grid = jax.block_until_ready(
        weight_sparse2(x_grid, weight, max_lanes=128, target_block_bytes=4096)
    )
    assert out_grid.shape == (256, F)
    assert jnp.allclose(out_grid, x_grid * weight[None, :], atol=1e-6, rtol=1e-6)

    print("KERNEL_OK")
</pallas_src>

<mosaic_0001>
module attributes {stable_mosaic.version = 11 : i64} {
  func.func @_weight_sparse2_kernel(%arg0: i32, %arg1: memref<2x32xf32, #tpu.memory_space<vmem>>, %arg2: memref<1x32xf32, #tpu.memory_space<vmem>>, %arg3: memref<2x32xf32, #tpu.memory_space<vmem>>) attributes {dimension_semantics = [#tpu.dimension_semantics<parallel>], iteration_bounds = array<i64: 1>, scalar_prefetch = 0 : i64, scratch_operands = 0 : i64, tpu.core_type = #tpu.core_type<tc>, window_params = [{transform_indices = @transform_0, window_bounds = array<i64: 2, 32>}, {pipeline_mode = #tpu.pipeline_mode<synchronous>, transform_indices = @transform_1, window_bounds = array<i64: 1, 32>}, {transform_indices = @transform_2, window_bounds = array<i64: 2, 32>}]} {
    %c0 = arith.constant 0 : index
    %c0_0 = arith.constant 0 : index
    %0 = vector.load %arg1[%c0, %c0_0] : memref<2x32xf32, #tpu.memory_space<vmem>>, vector<2x32xf32>
    %c0_1 = arith.constant 0 : index
    %c0_2 = arith.constant 0 : index
    %1 = vector.load %arg2[%c0_1, %c0_2] : memref<1x32xf32, #tpu.memory_space<vmem>>, vector<1x32xf32>
    %2 = vector.broadcast %1 : vector<1x32xf32> to vector<2x32xf32>
    %3 = arith.mulf %0, %2 : vector<2x32xf32>
    %c0_3 = arith.constant 0 : index
    %c0_4 = arith.constant 0 : index
    %4 = vector.load %arg3[%c0_3, %c0_4] : memref<2x32xf32, #tpu.memory_space<vmem>>, vector<2x32xf32>
    tpu.vector_store %arg3[%c0_3, %c0_4], %3 {strides = array<i32>} : memref<2x32xf32, #tpu.memory_space<vmem>>, vector<2x32xf32>,
    return
  }
  func.func @transform_0(%arg0: i32) -> (i32, i32) {
    %c0_i32 = arith.constant 0 : i32
    %c0_i32_0 = arith.constant 0 : i32
    return %arg0, %c0_i32 : i32, i32
  }
  func.func @transform_1(%arg0: i32) -> (i32, i32) {
    %c0_i32 = arith.constant 0 : i32
    %c0_i32_0 = arith.constant 0 : i32
    %c0_i32_1 = arith.constant 0 : i32
    return %c0_i32, %c0_i32_0 : i32, i32
  }
  func.func @transform_2(%arg0: i32) -> (i32, i32) {
    %c0_i32 = arith.constant 0 : i32
    %c0_i32_0 = arith.constant 0 : i32
    return %arg0, %c0_i32 : i32, i32
  }
}

</mosaic_0001>

<llo_original>
// kernel: tpu_custom_call.1
$region0: #{tpu_custom_call.1}
  #allocation0 [shape = 'u32[]', space=smem, size = 0x4, offset = 0x4, fixed_abs, tag = 'smem constant byte address 0x4 - core index']
  #allocation1 [shape = 'u32[144,128]{1,0:T(1,128)}', space=vmem, size = 0x12000, scoped, tag = 'internal scratch']
  %s0 = inlined_call_operand.hbm [shape: f32[2,32], index: 0, kind: input, shape index: {}]
  %s1 = inlined_call_operand.vmem [shape: f32[1,32], index: 1, kind: input, shape index: {}]
  %s2 = inlined_call_operand.hbm [shape: f32[2,32], index: 2, kind: output, shape index: {}]
  %s3 = sld [smem:[#allocation0]]
  $region22: #{tpu_custom_call.1} parent=0
    _
  %s5 = ssub.s32 1, %s3
  %s6 = scalar_select 0, %s5, %s3
  $region1: #{tpu_custom_call.1} parent=0
    #allocation2 [shape = 'u8[1024]{0}', space=vmem, size = 0x400, scoped, tag = 'input window, operand 0, single buffered']
    #allocation3 [shape = 's32[1]{0}', space=sflag, size = 0x4, scoped, tag = 'scoped memory for tpu_custom_call.1']
    #allocation4 [shape = 's32[1]{0}', space=sflag, size = 0x4, scoped, tag = 'scoped memory for tpu_custom_call.1']
    #allocation5 [shape = 'u8[1024]{0}', space=vmem, size = 0x400, scoped, tag = 'output window, operand 0, single buffered']
    %7 = vsyncpa [#allocation3], 0
    %8 = vsyncpa [#allocation4], 0
    // Predicated region
    $region2: #{tpu_custom_call.1} parent=1 // pred_check
      _
    $region3: #{tpu_custom_call.1} parent=1 // pred_check_branch
      %10 = sbr.rel (0) target = $region5
    $region4: #{tpu_custom_call.1} parent=1 // pred_region
      %s12 = ssub.s32 32, 32
      %13 = vsyncadd [#allocation3], %s12
      %s15 = sshll.u32 [#allocation2], 4
      %s16 = int_to_ptr.vmem [resolvable:$true] %s15
      %18 = dma.hbm_to_vmem [thread:$0]  %s0, 32, %s16, [#allocation3]
    $region5: #{tpu_custom_call.1} parent=1 // pred_fallthru
      _
    // Predicated region
    $region6: #{tpu_custom_call.1} parent=1 // pred_check
      _
    $region7: #{tpu_custom_call.1} parent=1 // pred_check_branch
      %20 = sbr.rel (0) target = $region9
    $region8: #{tpu_custom_call.1} parent=1 // pred_region
      _
    $region9: #{tpu_custom_call.1} parent=1 // pred_fallthru
      _
    // Predicated region
    $region10: #{tpu_custom_call.1} parent=1 // pred_check
      _
    $region11: #{tpu_custom_call.1} parent=1 // pred_check_branch
      %22 = sbr.rel (0) target = $region13
    $region12: #{tpu_custom_call.1} parent=1 // pred_region
      %23 = dma.done [#allocation3], 32
    $region13: #{tpu_custom_call.1} parent=1 // pred_fallthru
      _
    %v24 = vld [vmem:[#allocation2] sm:$0x3]
    %v25 = vld [vmem:[%s1] sm:$0x1]
    %v27 = vlaneseq
    %v28 = vshrl.u32 %v27, 7
    %v29 = vsub.s32 0, %v28
    %v30 = vrot.slane %v25, %v29
    %v32 = vmul.f32 %v24, %v30
    %vm33 = vcmask 254976
    %34 = vst.msk [vmem:[#allocation5] sm:$0x3] %vm33, %v32
    // Predicated region
    $region14: #{tpu_custom_call.1} parent=1 // pred_check
      _
    $region15: #{tpu_custom_call.1} parent=1 // pred_check_branch
      %36 = sbr.rel (0) target = $region17
    $region16: #{tpu_custom_call.1} parent=1 // pred_region
      %s38 = ssub.s32 32, 32
      %39 = vsyncadd [#allocation4], %s38
      %s41 = sshll.u32 [#allocation5], 4
      %s42 = int_to_ptr.vmem [resolvable:$true] %s41
      %44 = dma.vmem_to_hbm [thread:$0]  %s42, 32, %s2, [#allocation4]
    $region17: #{tpu_custom_call.1} parent=1 // pred_fallthru
      _
    // Predicated region
    $region18: #{tpu_custom_call.1} parent=1 // pred_check
      _
    $region19: #{tpu_custom_call.1} parent=1 // pred_check_branch
      %46 = sbr.rel (0) target = $region21
    $region20: #{tpu_custom_call.1} parent=1 // pred_region
      %47 = dma.done [#allocation4], 32
    $region21: #{tpu_custom_call.1} parent=1 // pred_fallthru
      _
    %48 = vsyncpa [#allocation3], 1
    %49 = vsyncpa [#allocation4], 1

</llo_original>
